<compile_context>
chip_gen: v5e
topology: v5e:2x2
jax: 0.10.0
libtpu: 0.0.40
codegen_flags: <defaults>
</compile_context>

<pallas_src>
import functools

import jax
import jax.numpy as jnp
from jax import lax
from jax.experimental import pallas as pl
from jax.experimental.pallas import tpu as pltpu


def _cdc_unshared_kernel(rc_ref, x_ref, w_ref, o_ref, xp_ref, pt_ref, rtp_ref,
                         *, H, W, Cin, Cout):
    # rc_ref:  (2, H*W) int32   row 0 = h index of each flat pixel, row 1 = w index
    # x_ref:   (Cin, H*W)       input image (flat pixels on the lane axis)
    # w_ref:   (9*Cout, 9*Cin)  packed weights: row = tap*Cout+o, col = shift*Cin+c
    #                           (theta already folded into the centre tap)
    # o_ref:   (Cout, H*W)      lane-dense output
    # xp_ref:  (Cin, H*W + 2*(W+1))   f32 scratch: zero-padded flat input
    # pt_ref:  (9*Cin, H*W)           f32 scratch: the 9 reflect-shifted views
    # rtp_ref: (9*Cout, H*W + 2*(W+1)) f32 scratch: zero-padded per-tap partials
    HW = H * W
    P = W + 1
    f32 = jnp.float32

    row = rc_ref[0:1, :]
    col = rc_ref[1:2, :]
    row0 = row == 0
    rowL = row == H - 1
    col0 = col == 0
    colL = col == W - 1

    # Zero-padded flattened input (only the two pad strips are zeroed).
    zpad_in = jnp.zeros((Cin, P), f32)
    xp_ref[:, 0:P] = zpad_in
    xp_ref[:, P + HW:P + HW + P] = zpad_in
    xp_ref[:, P:P + HW] = x_ref[...].astype(f32)

    # The 9 flat-shifted copies of x (shift = dh*W + dw, dh,dw in {-1,0,1}).
    shifted = {}
    for a in (-1, 0, 1):
        for b in (-1, 0, 1):
            s = a * W + b
            shifted[s] = xp_ref[:, P + s:P + s + HW]

    # Build the 9 reflection-padded shifted views and stack them into pt_ref.
    # View order matches the packed-weight shift order: (dh, dw) row-major.
    i = 0
    for a in (-1, 0, 1):
        rmask = row0 if a == -1 else (rowL if a == 1 else None)
        for b in (-1, 0, 1):
            cmask = col0 if b == -1 else (colL if b == 1 else None)
            v = shifted[a * W + b]
            if rmask is not None:
                v = jnp.where(rmask, shifted[-a * W + b], v)
            if cmask is not None:
                if rmask is not None:
                    vr = jnp.where(rmask, shifted[-a * W - b], shifted[a * W - b])
                else:
                    vr = shifted[a * W - b]
                v = jnp.where(cmask, vr, v)
            pt_ref[i * Cin:(i + 1) * Cin, :] = v
            i += 1

    # Single fused MXU matmul: (9*Cout, 9*Cin) x (9*Cin, H*W) -> (9*Cout, H*W).
    rt = jnp.dot(w_ref[...].astype(f32), pt_ref[...],
                 preferred_element_type=f32)

    zpad_out = jnp.zeros((9 * Cout, P), f32)
    rtp_ref[:, 0:P] = zpad_out
    rtp_ref[:, P + HW:P + HW + P] = zpad_out
    rtp_ref[:, P:P + HW] = rt

    # 3x3 zero-padded tap accumulation done in flat pixel space.
    acc = jnp.zeros((Cout, HW), f32)
    for kh in range(3):
        for kw in range(3):
            t = kh * 3 + kw
            s = (kh - 1) * W + (kw - 1)
            contrib = rtp_ref[t * Cout:(t + 1) * Cout, P + s:P + s + HW]
            if kh == 0:
                contrib = jnp.where(row0, 0.0, contrib)
            elif kh == 2:
                contrib = jnp.where(rowL, 0.0, contrib)
            if kw == 0:
                contrib = jnp.where(col0, 0.0, contrib)
            elif kw == 2:
                contrib = jnp.where(colL, 0.0, contrib)
            acc = acc + contrib

    o_ref[...] = acc.astype(o_ref.dtype)


# Module declaration order: [conv, conv_lt, conv_mt, conv_rt, conv_lm, conv_mr,
#                            conv_ld, conv_md, conv_rd]
# mapped to shift order (dh, dw) row-major over {0,1,2}^2.
_MODULE_TO_SHIFT_ORDER = (1, 4, 6, 2, 0, 7, 3, 5, 8)


def conv2d_cd_pixel_difference_matrix5x5_unshared(x_nchw, weights, theta=0.7):
    """JAX/Pallas port of Conv2d_cd_pixel_difference_matrix5x5_unshared.forward.

    weights: sequence of 9 (Cout, Cin, 3, 3) arrays in module declaration order.
    """
    B, C, H, W = x_nchw.shape
    weights = [jnp.asarray(w) for w in weights]
    assert len(weights) == 9
    O = weights[0].shape[0]

    if abs(float(theta)) < 1e-8 or C < 2 or H < 2:
        # Matches the module's early return: only the plain centre conv.
        # TODO(synk): edge-case path not exercised at demo shapes; uses XLA conv.
        return lax.conv_general_dilated(
            x_nchw, weights[0], (1, 1), ((1, 1), (1, 1)),
            dimension_numbers=("NCHW", "OIHW", "NCHW"))

    HW = H * W

    # Reorder weights to shift order, fold theta into the centre tap, and pack
    # into the (9*Cout, 9*Cin) matrix the kernel's matmul consumes.
    w_shift = jnp.stack([weights[j] for j in _MODULE_TO_SHIFT_ORDER], axis=0)  # (9,O,C,3,3)
    kdiff = w_shift.sum(axis=(3, 4))                                           # (9,O,C)
    w_mod = w_shift.at[:, :, :, 1, 1].add(-theta * kdiff)
    w_packed = jnp.transpose(w_mod, (3, 4, 1, 0, 2)).reshape(9 * O, 9 * C)
    w_packed = w_packed.astype(jnp.float32)

    x_flat = x_nchw.reshape(B, C, HW)  # free reshape of contiguous NCHW
    rc = jnp.stack(
        [jnp.repeat(jnp.arange(H, dtype=jnp.int32), W),
         jnp.tile(jnp.arange(W, dtype=jnp.int32), H)], axis=0)  # (2, HW)

    kernel = functools.partial(_cdc_unshared_kernel, H=H, W=W, Cin=C, Cout=O)
    pad_w = HW + 2 * (W + 1)

    out_flat = pl.pallas_call(
        kernel,
        out_shape=jax.ShapeDtypeStruct((B, O, HW), x_nchw.dtype),
        grid_spec=pltpu.PrefetchScalarGridSpec(
            num_scalar_prefetch=0,
            grid=(B,),
            in_specs=[
                pl.BlockSpec((2, HW), lambda b: (0, 0)),
                pl.BlockSpec((None, C, HW), lambda b: (b, 0, 0)),
                pl.BlockSpec((9 * O, 9 * C), lambda b: (0, 0)),
            ],
            out_specs=pl.BlockSpec((None, O, HW), lambda b: (b, 0, 0)),
            scratch_shapes=[
                pltpu.VMEM((C, pad_w), jnp.float32),
                pltpu.VMEM((9 * C, HW), jnp.float32),
                pltpu.VMEM((9 * O, pad_w), jnp.float32),
            ],
        ),
        compiler_params=pltpu.CompilerParams(
            dimension_semantics=("parallel",)),
    )(rc, x_flat, w_packed)

    # TODO(synk): for large H*W add H-tiling with a 1-row halo so VMEM stays
    # bounded (needed for v7x's smaller VMEM); whole-image blocks are fine at
    # demo resolution.
    return out_flat.reshape(B, O, H, W)


def _reference_nchw(x, weights, theta):
    """Pure-JAX mirror of the PyTorch forward (9 convs + 9 1x1 diff convs)."""
    B, C, H, W = x.shape
    xpad = jnp.pad(x, ((0, 0), (0, 0), (1, 1), (1, 1)), mode="reflect")
    views = [
        x,                              # conv (centre)
        xpad[:, :, 0:H, 0:W],           # conv_lt
        xpad[:, :, 1:H + 1, 0:W],       # conv_mt
        xpad[:, :, 2:H + 2, 0:W],       # conv_rt
        xpad[:, :, 0:H, 1:W + 1],       # conv_lm
        xpad[:, :, 2:H + 2, 1:W + 1],   # conv_mr
        xpad[:, :, 0:H, 2:W + 2],       # conv_ld
        xpad[:, :, 1:H + 1, 2:W + 2],   # conv_md
        xpad[:, :, 2:H + 2, 2:W + 2],   # conv_rd
    ]
    out = None
    for v, w in zip(views, weights):
        o3 = lax.conv_general_dilated(
            v, w, (1, 1), ((1, 1), (1, 1)),
            dimension_numbers=("NCHW", "OIHW", "NCHW"))
        kd = w.sum(axis=(2, 3))[:, :, None, None]
        o1 = lax.conv_general_dilated(
            v, kd, (1, 1), ((0, 0), (0, 0)),
            dimension_numbers=("NCHW", "OIHW", "NCHW"))
        term = o3 - theta * o1
        out = term if out is None else out + term
    return out


if __name__ == "__main__":
    key = jax.random.PRNGKey(0)
    keys = jax.random.split(key, 10)

    B, Cin, H, W, Cout = 2, 4, 16, 16, 8
    theta = 0.7

    x = jax.random.normal(keys[0], (B, Cin, H, W), dtype=jnp.float32)

    # 9 independent Conv2d-style weights (uniform init, bias=False), module order:
    # [conv, conv_lt, conv_mt, conv_rt, conv_lm, conv_mr, conv_ld, conv_md, conv_rd]
    fan_in = Cin * 3 * 3
    bound = 1.0 / (fan_in ** 0.5)
    weights = [
        jax.random.uniform(keys[1 + i], (Cout, Cin, 3, 3), jnp.float32,
                           -bound, bound)
        for i in range(9)
    ]

    out = conv2d_cd_pixel_difference_matrix5x5_unshared(x, weights, theta=theta)
    out = jax.block_until_ready(out)

    ref = _reference_nchw(x, weights, theta)
    assert out.shape == (B, Cout, H, W), out.shape
    max_err = float(jnp.max(jnp.abs(out - ref)))
    assert jnp.allclose(out, ref, atol=2e-3, rtol=2e-3), max_err

    print("KERNEL_OK")
</pallas_src>

<mosaic_0001>
module attributes {stable_mosaic.version = 11 : i64} {
  func.func @_cdc_unshared_kernel(%arg0: i32, %arg1: memref<2x256xi32, #tpu.memory_space<vmem>>, %arg2: memref<1x4x256xf32, #tpu.memory_space<vmem>>, %arg3: memref<72x36xf32, #tpu.memory_space<vmem>>, %arg4: memref<1x8x256xf32, #tpu.memory_space<vmem>>, %arg5: memref<4x290xf32, #tpu.memory_space<vmem>>, %arg6: memref<36x256xf32, #tpu.memory_space<vmem>>, %arg7: memref<72x290xf32, #tpu.memory_space<vmem>>) attributes {dimension_semantics = [#tpu.dimension_semantics<parallel>], iteration_bounds = array<i64: 2>, scalar_prefetch = 0 : i64, scratch_operands = 3 : i64, tpu.core_type = #tpu.core_type<tc>, window_params = [{pipeline_mode = #tpu.pipeline_mode<synchronous>, transform_indices = @transform_0, window_bounds = array<i64: 2, 256>}, {transform_indices = @transform_1, window_bounds = array<i64: 1, 4, 256>}, {pipeline_mode = #tpu.pipeline_mode<synchronous>, transform_indices = @transform_2, window_bounds = array<i64: 72, 36>}, {transform_indices = @transform_3, window_bounds = array<i64: 1, 8, 256>}]} {
    %c0 = arith.constant 0 : index
    %c0_0 = arith.constant 0 : index
    %0 = vector.load %arg1[%c0, %c0_0] : memref<2x256xi32, #tpu.memory_space<vmem>>, vector<1x256xi32>
    %c1 = arith.constant 1 : index
    %c0_1 = arith.constant 0 : index
    %1 = vector.load %arg1[%c1, %c0_1] : memref<2x256xi32, #tpu.memory_space<vmem>>, vector<1x256xi32>
    %c0_i32 = arith.constant 0 : i32
    %2 = vector.broadcast %c0_i32 : i32 to vector<1x256xi32>
    %3 = arith.cmpi eq, %0, %2 : vector<1x256xi32>
    %c15_i32 = arith.constant 15 : i32
    %4 = vector.broadcast %c15_i32 : i32 to vector<1x256xi32>
    %5 = arith.cmpi eq, %0, %4 : vector<1x256xi32>
    %c0_i32_2 = arith.constant 0 : i32
    %6 = vector.broadcast %c0_i32_2 : i32 to vector<1x256xi32>
    %7 = arith.cmpi eq, %1, %6 : vector<1x256xi32>
    %c15_i32_3 = arith.constant 15 : i32
    %8 = vector.broadcast %c15_i32_3 : i32 to vector<1x256xi32>
    %9 = arith.cmpi eq, %1, %8 : vector<1x256xi32>
    %cst = arith.constant 0.000000e+00 : f32
    %10 = vector.broadcast %cst : f32 to vector<4x17xf32>
    %c0_4 = arith.constant 0 : index
    %c0_5 = arith.constant 0 : index
    %11 = vector.load %arg5[%c0_4, %c0_5] : memref<4x290xf32, #tpu.memory_space<vmem>>, vector<4x17xf32>
    tpu.vector_store %arg5[%c0_4, %c0_5], %10 {strides = array<i32>} : memref<4x290xf32, #tpu.memory_space<vmem>>, vector<4x17xf32>,
    %c0_6 = arith.constant 0 : index
    %c273 = arith.constant 273 : index
    %12 = vector.load %arg5[%c0_6, %c273] : memref<4x290xf32, #tpu.memory_space<vmem>>, vector<4x17xf32>
    tpu.vector_store %arg5[%c0_6, %c273], %10 {strides = array<i32>} : memref<4x290xf32, #tpu.memory_space<vmem>>, vector<4x17xf32>,
    %c0_7 = arith.constant 0 : index
    %c0_8 = arith.constant 0 : index
    %c0_9 = arith.constant 0 : index
    %13 = vector.load %arg2[%c0_7, %c0_8, %c0_9] : memref<1x4x256xf32, #tpu.memory_space<vmem>>, vector<1x4x256xf32>
    %14 = vector.shape_cast %13 : vector<1x4x256xf32> to vector<4x256xf32>
    %c0_10 = arith.constant 0 : index
    %c17 = arith.constant 17 : index
    %15 = vector.load %arg5[%c0_10, %c17] : memref<4x290xf32, #tpu.memory_space<vmem>>, vector<4x256xf32>
    tpu.vector_store %arg5[%c0_10, %c17], %14 {strides = array<i32>} : memref<4x290xf32, #tpu.memory_space<vmem>>, vector<4x256xf32>,
    %c0_11 = arith.constant 0 : index
    %c0_12 = arith.constant 0 : index
    %16 = vector.load %arg5[%c0_11, %c0_12] : memref<4x290xf32, #tpu.memory_space<vmem>>, vector<4x256xf32>
    %c0_13 = arith.constant 0 : index
    %c1_14 = arith.constant 1 : index
    %17 = vector.load %arg5[%c0_13, %c1_14] : memref<4x290xf32, #tpu.memory_space<vmem>>, vector<4x256xf32>
    %c0_15 = arith.constant 0 : index
    %c2 = arith.constant 2 : index
    %18 = vector.load %arg5[%c0_15, %c2] : memref<4x290xf32, #tpu.memory_space<vmem>>, vector<4x256xf32>
    %c0_16 = arith.constant 0 : index
    %c16 = arith.constant 16 : index
    %19 = vector.load %arg5[%c0_16, %c16] : memref<4x290xf32, #tpu.memory_space<vmem>>, vector<4x256xf32>
    %c0_17 = arith.constant 0 : index
    %c17_18 = arith.constant 17 : index
    %20 = vector.load %arg5[%c0_17, %c17_18] : memref<4x290xf32, #tpu.memory_space<vmem>>, vector<4x256xf32>
    %c0_19 = arith.constant 0 : index
    %c18 = arith.constant 18 : index
    %21 = vector.load %arg5[%c0_19, %c18] : memref<4x290xf32, #tpu.memory_space<vmem>>, vector<4x256xf32>
    %c0_20 = arith.constant 0 : index
    %c32 = arith.constant 32 : index
    %22 = vector.load %arg5[%c0_20, %c32] : memref<4x290xf32, #tpu.memory_space<vmem>>, vector<4x256xf32>
    %c0_21 = arith.constant 0 : index
    %c33 = arith.constant 33 : index
    %23 = vector.load %arg5[%c0_21, %c33] : memref<4x290xf32, #tpu.memory_space<vmem>>, vector<4x256xf32>
    %c0_22 = arith.constant 0 : index
    %c34 = arith.constant 34 : index
    %24 = vector.load %arg5[%c0_22, %c34] : memref<4x290xf32, #tpu.memory_space<vmem>>, vector<4x256xf32>
    %25 = vector.shape_cast %3 : vector<1x256xi1> to vector<1x256xi1>
    %26 = vector.broadcast %25 : vector<1x256xi1> to vector<4x256xi1>
    %27 = arith.select %26, %22, %16 : vector<4x256xi1>, vector<4x256xf32>
    %28 = vector.shape_cast %3 : vector<1x256xi1> to vector<1x256xi1>
    %29 = vector.broadcast %28 : vector<1x256xi1> to vector<4x256xi1>
    %30 = arith.select %29, %24, %18 : vector<4x256xi1>, vector<4x256xf32>
    %31 = vector.shape_cast %7 : vector<1x256xi1> to vector<1x256xi1>
    %32 = vector.broadcast %31 : vector<1x256xi1> to vector<4x256xi1>
    %33 = arith.select %32, %30, %27 : vector<4x256xi1>, vector<4x256xf32>
    %c0_23 = arith.constant 0 : index
    %c0_24 = arith.constant 0 : index
    %34 = vector.load %arg6[%c0_23, %c0_24] : memref<36x256xf32, #tpu.memory_space<vmem>>, vector<4x256xf32>
    tpu.vector_store %arg6[%c0_23, %c0_24], %33 {strides = array<i32>} : memref<36x256xf32, #tpu.memory_space<vmem>>, vector<4x256xf32>,
    %35 = vector.shape_cast %3 : vector<1x256xi1> to vector<1x256xi1>
    %36 = vector.broadcast %35 : vector<1x256xi1> to vector<4x256xi1>
    %37 = arith.select %36, %23, %17 : vector<4x256xi1>, vector<4x256xf32>
    %c4 = arith.constant 4 : index
    %c0_25 = arith.constant 0 : index
    %38 = vector.load %arg6[%c4, %c0_25] : memref<36x256xf32, #tpu.memory_space<vmem>>, vector<4x256xf32>
    tpu.vector_store %arg6[%c4, %c0_25], %37 {strides = array<i32>} : memref<36x256xf32, #tpu.memory_space<vmem>>, vector<4x256xf32>,
    %39 = vector.shape_cast %3 : vector<1x256xi1> to vector<1x256xi1>
    %40 = vector.broadcast %39 : vector<1x256xi1> to vector<4x256xi1>
    %41 = arith.select %40, %24, %18 : vector<4x256xi1>, vector<4x256xf32>
    %42 = vector.shape_cast %3 : vector<1x256xi1> to vector<1x256xi1>
    %43 = vector.broadcast %42 : vector<1x256xi1> to vector<4x256xi1>
    %44 = arith.select %43, %22, %16 : vector<4x256xi1>, vector<4x256xf32>
    %45 = vector.shape_cast %9 : vector<1x256xi1> to vector<1x256xi1>
    %46 = vector.broadcast %45 : vector<1x256xi1> to vector<4x256xi1>
    %47 = arith.select %46, %44, %41 : vector<4x256xi1>, vector<4x256xf32>
    %c8 = arith.constant 8 : index
    %c0_26 = arith.constant 0 : index
    %48 = vector.load %arg6[%c8, %c0_26] : memref<36x256xf32, #tpu.memory_space<vmem>>, vector<4x256xf32>
    tpu.vector_store %arg6[%c8, %c0_26], %47 {strides = array<i32>} : memref<36x256xf32, #tpu.memory_space<vmem>>, vector<4x256xf32>,
    %49 = vector.shape_cast %7 : vector<1x256xi1> to vector<1x256xi1>
    %50 = vector.broadcast %49 : vector<1x256xi1> to vector<4x256xi1>
    %51 = arith.select %50, %21, %19 : vector<4x256xi1>, vector<4x256xf32>
    %c12 = arith.constant 12 : index
    %c0_27 = arith.constant 0 : index
    %52 = vector.load %arg6[%c12, %c0_27] : memref<36x256xf32, #tpu.memory_space<vmem>>, vector<4x256xf32>
    tpu.vector_store %arg6[%c12, %c0_27], %51 {strides = array<i32>} : memref<36x256xf32, #tpu.memory_space<vmem>>, vector<4x256xf32>,
    %c16_28 = arith.constant 16 : index
    %c0_29 = arith.constant 0 : index
    %53 = vector.load %arg6[%c16_28, %c0_29] : memref<36x256xf32, #tpu.memory_space<vmem>>, vector<4x256xf32>
    tpu.vector_store %arg6[%c16_28, %c0_29], %20 {strides = array<i32>} : memref<36x256xf32, #tpu.memory_space<vmem>>, vector<4x256xf32>,
    %54 = vector.shape_cast %9 : vector<1x256xi1> to vector<1x256xi1>
    %55 = vector.broadcast %54 : vector<1x256xi1> to vector<4x256xi1>
    %56 = arith.select %55, %19, %21 : vector<4x256xi1>, vector<4x256xf32>
    %c20 = arith.constant 20 : index
    %c0_30 = arith.constant 0 : index
    %57 = vector.load %arg6[%c20, %c0_30] : memref<36x256xf32, #tpu.memory_space<vmem>>, vector<4x256xf32>
    tpu.vector_store %arg6[%c20, %c0_30], %56 {strides = array<i32>} : memref<36x256xf32, #tpu.memory_space<vmem>>, vector<4x256xf32>,
    %58 = vector.shape_cast %5 : vector<1x256xi1> to vector<1x256xi1>
    %59 = vector.broadcast %58 : vector<1x256xi1> to vector<4x256xi1>
    %60 = arith.select %59, %16, %22 : vector<4x256xi1>, vector<4x256xf32>
    %61 = vector.shape_cast %5 : vector<1x256xi1> to vector<1x256xi1>
    %62 = vector.broadcast %61 : vector<1x256xi1> to vector<4x256xi1>
    %63 = arith.select %62, %18, %24 : vector<4x256xi1>, vector<4x256xf32>
    %64 = vector.shape_cast %7 : vector<1x256xi1> to vector<1x256xi1>
    %65 = vector.broadcast %64 : vector<1x256xi1> to vector<4x256xi1>
    %66 = arith.select %65, %63, %60 : vector<4x256xi1>, vector<4x256xf32>
    %c24 = arith.constant 24 : index
    %c0_31 = arith.constant 0 : index
    %67 = vector.load %arg6[%c24, %c0_31] : memref<36x256xf32, #tpu.memory_space<vmem>>, vector<4x256xf32>
    tpu.vector_store %arg6[%c24, %c0_31], %66 {strides = array<i32>} : memref<36x256xf32, #tpu.memory_space<vmem>>, vector<4x256xf32>,
    %68 = vector.shape_cast %5 : vector<1x256xi1> to vector<1x256xi1>
    %69 = vector.broadcast %68 : vector<1x256xi1> to vector<4x256xi1>
    %70 = arith.select %69, %17, %23 : vector<4x256xi1>, vector<4x256xf32>
    %c28 = arith.constant 28 : index
    %c0_32 = arith.constant 0 : index
    %71 = vector.load %arg6[%c28, %c0_32] : memref<36x256xf32, #tpu.memory_space<vmem>>, vector<4x256xf32>
    tpu.vector_store %arg6[%c28, %c0_32], %70 {strides = array<i32>} : memref<36x256xf32, #tpu.memory_space<vmem>>, vector<4x256xf32>,
    %72 = vector.shape_cast %5 : vector<1x256xi1> to vector<1x256xi1>
    %73 = vector.broadcast %72 : vector<1x256xi1> to vector<4x256xi1>
    %74 = arith.select %73, %18, %24 : vector<4x256xi1>, vector<4x256xf32>
    %75 = vector.shape_cast %5 : vector<1x256xi1> to vector<1x256xi1>
    %76 = vector.broadcast %75 : vector<1x256xi1> to vector<4x256xi1>
    %77 = arith.select %76, %16, %22 : vector<4x256xi1>, vector<4x256xf32>
    %78 = vector.shape_cast %9 : vector<1x256xi1> to vector<1x256xi1>
    %79 = vector.broadcast %78 : vector<1x256xi1> to vector<4x256xi1>
    %80 = arith.select %79, %77, %74 : vector<4x256xi1>, vector<4x256xf32>
    %c32_33 = arith.constant 32 : index
    %c0_34 = arith.constant 0 : index
    %81 = vector.load %arg6[%c32_33, %c0_34] : memref<36x256xf32, #tpu.memory_space<vmem>>, vector<4x256xf32>
    tpu.vector_store %arg6[%c32_33, %c0_34], %80 {strides = array<i32>} : memref<36x256xf32, #tpu.memory_space<vmem>>, vector<4x256xf32>,
    %c0_35 = arith.constant 0 : index
    %c0_36 = arith.constant 0 : index
    %82 = vector.load %arg3[%c0_35, %c0_36] : memref<72x36xf32, #tpu.memory_space<vmem>>, vector<72x36xf32>
    %c0_37 = arith.constant 0 : index
    %c0_38 = arith.constant 0 : index
    %83 = vector.load %arg6[%c0_37, %c0_38] : memref<36x256xf32, #tpu.memory_space<vmem>>, vector<36x256xf32>
    %cst_39 = arith.constant dense<0.000000e+00> : vector<72x256xf32>
    %84 = tpu.matmul %82, %83, %cst_39 {dimension_numbers = #tpu.dot_dimension_numbers<[1], [0], [0], [1], [0, 0, 1, 1], [], []>} : vector<72x36xf32>, vector<36x256xf32>, vector<72x256xf32> -> vector<72x256xf32>
    %cst_40 = arith.constant 0.000000e+00 : f32
    %85 = vector.broadcast %cst_40 : f32 to vector<72x17xf32>
    %c0_41 = arith.constant 0 : index
    %c0_42 = arith.constant 0 : index
    %86 = vector.load %arg7[%c0_41, %c0_42] : memref<72x290xf32, #tpu.memory_space<vmem>>, vector<72x17xf32>
    tpu.vector_store %arg7[%c0_41, %c0_42], %85 {strides = array<i32>} : memref<72x290xf32, #tpu.memory_space<vmem>>, vector<72x17xf32>,
    %c0_43 = arith.constant 0 : index
    %c273_44 = arith.constant 273 : index
    %87 = vector.load %arg7[%c0_43, %c273_44] : memref<72x290xf32, #tpu.memory_space<vmem>>, vector<72x17xf32>
    tpu.vector_store %arg7[%c0_43, %c273_44], %85 {strides = array<i32>} : memref<72x290xf32, #tpu.memory_space<vmem>>, vector<72x17xf32>,
    %c0_45 = arith.constant 0 : index
    %c17_46 = arith.constant 17 : index
    %88 = vector.load %arg7[%c0_45, %c17_46] : memref<72x290xf32, #tpu.memory_space<vmem>>, vector<72x256xf32>
    tpu.vector_store %arg7[%c0_45, %c17_46], %84 {strides = array<i32>} : memref<72x290xf32, #tpu.memory_space<vmem>>, vector<72x256xf32>,
    %cst_47 = arith.constant 0.000000e+00 : f32
    %89 = vector.broadcast %cst_47 : f32 to vector<8x256xf32>
    %c0_48 = arith.constant 0 : index
    %c0_49 = arith.constant 0 : index
    %90 = vector.load %arg7[%c0_48, %c0_49] : memref<72x290xf32, #tpu.memory_space<vmem>>, vector<8x256xf32>
    %cst_50 = arith.constant 0.000000e+00 : f32
    %91 = vector.shape_cast %3 : vector<1x256xi1> to vector<1x256xi1>
    %92 = vector.broadcast %91 : vector<1x256xi1> to vector<8x256xi1>
    %93 = vector.broadcast %cst_50 : f32 to vector<8x256xf32>
    %94 = arith.select %92, %93, %90 : vector<8x256xi1>, vector<8x256xf32>
    %cst_51 = arith.constant 0.000000e+00 : f32
    %95 = vector.shape_cast %7 : vector<1x256xi1> to vector<1x256xi1>
    %96 = vector.broadcast %95 : vector<1x256xi1> to vector<8x256xi1>
    %97 = vector.broadcast %cst_51 : f32 to vector<8x256xf32>
    %98 = arith.select %96, %97, %94 : vector<8x256xi1>, vector<8x256xf32>
    %99 = arith.addf %89, %98 : vector<8x256xf32>
    %c8_52 = arith.constant 8 : index
    %c1_53 = arith.constant 1 : index
    %100 = vector.load %arg7[%c8_52, %c1_53] : memref<72x290xf32, #tpu.memory_space<vmem>>, vector<8x256xf32>
    %cst_54 = arith.constant 0.000000e+00 : f32
    %101 = vector.shape_cast %3 : vector<1x256xi1> to vector<1x256xi1>
    %102 = vector.broadcast %101 : vector<1x256xi1> to vector<8x256xi1>
    %103 = vector.broadcast %cst_54 : f32 to vector<8x256xf32>
    %104 = arith.select %102, %103, %100 : vector<8x256xi1>, vector<8x256xf32>
    %105 = arith.addf %99, %104 : vector<8x256xf32>
    %c16_55 = arith.constant 16 : index
    %c2_56 = arith.constant 2 : index
    %106 = vector.load %arg7[%c16_55, %c2_56] : memref<72x290xf32, #tpu.memory_space<vmem>>, vector<8x256xf32>
    %cst_57 = arith.constant 0.000000e+00 : f32
    %107 = vector.shape_cast %3 : vector<1x256xi1> to vector<1x256xi1>
    %108 = vector.broadcast %107 : vector<1x256xi1> to vector<8x256xi1>
    %109 = vector.broadcast %cst_57 : f32 to vector<8x256xf32>
    %110 = arith.select %108, %109, %106 : vector<8x256xi1>, vector<8x256xf32>
    %cst_58 = arith.constant 0.000000e+00 : f32
    %111 = vector.shape_cast %9 : vector<1x256xi1> to vector<1x256xi1>
    %112 = vector.broadcast %111 : vector<1x256xi1> to vector<8x256xi1>
    %113 = vector.broadcast %cst_58 : f32 to vector<8x256xf32>
    %114 = arith.select %112, %113, %110 : vector<8x256xi1>, vector<8x256xf32>
    %115 = arith.addf %105, %114 : vector<8x256xf32>
    %c24_59 = arith.constant 24 : index
    %c16_60 = arith.constant 16 : index
    %116 = vector.load %arg7[%c24_59, %c16_60] : memref<72x290xf32, #tpu.memory_space<vmem>>, vector<8x256xf32>
    %cst_61 = arith.constant 0.000000e+00 : f32
    %117 = vector.shape_cast %7 : vector<1x256xi1> to vector<1x256xi1>
    %118 = vector.broadcast %117 : vector<1x256xi1> to vector<8x256xi1>
    %119 = vector.broadcast %cst_61 : f32 to vector<8x256xf32>
    %120 = arith.select %118, %119, %116 : vector<8x256xi1>, vector<8x256xf32>
    %121 = arith.addf %115, %120 : vector<8x256xf32>
    %c32_62 = arith.constant 32 : index
    %c17_63 = arith.constant 17 : index
    %122 = vector.load %arg7[%c32_62, %c17_63] : memref<72x290xf32, #tpu.memory_space<vmem>>, vector<8x256xf32>
    %123 = arith.addf %121, %122 : vector<8x256xf32>
    %c40 = arith.constant 40 : index
    %c18_64 = arith.constant 18 : index
    %124 = vector.load %arg7[%c40, %c18_64] : memref<72x290xf32, #tpu.memory_space<vmem>>, vector<8x256xf32>
    %cst_65 = arith.constant 0.000000e+00 : f32
    %125 = vector.shape_cast %9 : vector<1x256xi1> to vector<1x256xi1>
    %126 = vector.broadcast %125 : vector<1x256xi1> to vector<8x256xi1>
    %127 = vector.broadcast %cst_65 : f32 to vector<8x256xf32>
    %128 = arith.select %126, %127, %124 : vector<8x256xi1>, vector<8x256xf32>
    %129 = arith.addf %123, %128 : vector<8x256xf32>
    %c48 = arith.constant 48 : index
    %c32_66 = arith.constant 32 : index
    %130 = vector.load %arg7[%c48, %c32_66] : memref<72x290xf32, #tpu.memory_space<vmem>>, vector<8x256xf32>
    %cst_67 = arith.constant 0.000000e+00 : f32
    %131 = vector.shape_cast %5 : vector<1x256xi1> to vector<1x256xi1>
    %132 = vector.broadcast %131 : vector<1x256xi1> to vector<8x256xi1>
    %133 = vector.broadcast %cst_67 : f32 to vector<8x256xf32>
    %134 = arith.select %132, %133, %130 : vector<8x256xi1>, vector<8x256xf32>
    %cst_68 = arith.constant 0.000000e+00 : f32
    %135 = vector.shape_cast %7 : vector<1x256xi1> to vector<1x256xi1>
    %136 = vector.broadcast %135 : vector<1x256xi1> to vector<8x256xi1>
    %137 = vector.broadcast %cst_68 : f32 to vector<8x256xf32>
    %138 = arith.select %136, %137, %134 : vector<8x256xi1>, vector<8x256xf32>
    %139 = arith.addf %129, %138 : vector<8x256xf32>
    %c56 = arith.constant 56 : index
    %c33_69 = arith.constant 33 : index
    %140 = vector.load %arg7[%c56, %c33_69] : memref<72x290xf32, #tpu.memory_space<vmem>>, vector<8x256xf32>
    %cst_70 = arith.constant 0.000000e+00 : f32
    %141 = vector.shape_cast %5 : vector<1x256xi1> to vector<1x256xi1>
    %142 = vector.broadcast %141 : vector<1x256xi1> to vector<8x256xi1>
    %143 = vector.broadcast %cst_70 : f32 to vector<8x256xf32>
    %144 = arith.select %142, %143, %140 : vector<8x256xi1>, vector<8x256xf32>
    %145 = arith.addf %139, %144 : vector<8x256xf32>
    %c64 = arith.constant 64 : index
    %c34_71 = arith.constant 34 : index
    %146 = vector.load %arg7[%c64, %c34_71] : memref<72x290xf32, #tpu.memory_space<vmem>>, vector<8x256xf32>
    %cst_72 = arith.constant 0.000000e+00 : f32
    %147 = vector.shape_cast %5 : vector<1x256xi1> to vector<1x256xi1>
    %148 = vector.broadcast %147 : vector<1x256xi1> to vector<8x256xi1>
    %149 = vector.broadcast %cst_72 : f32 to vector<8x256xf32>
    %150 = arith.select %148, %149, %146 : vector<8x256xi1>, vector<8x256xf32>
    %cst_73 = arith.constant 0.000000e+00 : f32
    %151 = vector.shape_cast %9 : vector<1x256xi1> to vector<1x256xi1>
    %152 = vector.broadcast %151 : vector<1x256xi1> to vector<8x256xi1>
    %153 = vector.broadcast %cst_73 : f32 to vector<8x256xf32>
    %154 = arith.select %152, %153, %150 : vector<8x256xi1>, vector<8x256xf32>
    %155 = arith.addf %145, %154 : vector<8x256xf32>
    %c0_74 = arith.constant 0 : index
    %c0_75 = arith.constant 0 : index
    %c0_76 = arith.constant 0 : index
    %156 = vector.load %arg4[%c0_74, %c0_75, %c0_76] : memref<1x8x256xf32, #tpu.memory_space<vmem>>, vector<1x8x256xf32>
    %157 = vector.shape_cast %156 : vector<1x8x256xf32> to vector<8x256xf32>
    %158 = vector.shape_cast %155 : vector<8x256xf32> to vector<1x8x256xf32>
    tpu.vector_store %arg4[%c0_74, %c0_75, %c0_76], %158 {strides = array<i32>} : memref<1x8x256xf32, #tpu.memory_space<vmem>>, vector<1x8x256xf32>,
    return
  }
  func.func @transform_0(%arg0: i32) -> (i32, i32) {
    %c0_i32 = arith.constant 0 : i32
    %c0_i32_0 = arith.constant 0 : i32
    %c0_i32_1 = arith.constant 0 : i32
    return %c0_i32, %c0_i32_0 : i32, i32
  }
  func.func @transform_1(%arg0: i32) -> (i32, i32, i32) {
    %c0_i32 = arith.constant 0 : i32
    %c0_i32_0 = arith.constant 0 : i32
    %c0_i32_1 = arith.constant 0 : i32
    return %arg0, %c0_i32, %c0_i32_0 : i32, i32, i32
  }
  func.func @transform_2(%arg0: i32) -> (i32, i32) {
    %c0_i32 = arith.constant 0 : i32
    %c0_i32_0 = arith.constant 0 : i32
    %c0_i32_1 = arith.constant 0 : i32
    return %c0_i32, %c0_i32_0 : i32, i32
  }
  func.func @transform_3(%arg0: i32) -> (i32, i32, i32) {
    %c0_i32 = arith.constant 0 : i32
    %c0_i32_0 = arith.constant 0 : i32
    %c0_i32_1 = arith.constant 0 : i32
    return %arg0, %c0_i32, %c0_i32_0 : i32, i32, i32
  }
}

</mosaic_0001>

<llo_original>
// kernel: tpu_custom_call.1
$region0: #{tpu_custom_call.1}
  #allocation0 [shape = 'u32[]', space=smem, size = 0x4, offset = 0x4, fixed_abs, tag = 'smem constant byte address 0x4 - core index']
  #allocation1 [shape = 'u32[72,128]{1,0:T(1,128)}', space=vmem, size = 0x9000, scoped, tag = 'internal scratch']
  #allocation2 [shape = 'f32[4,290]{1,0:T(4,128)}', space=vmem, size = 0x1800, scoped, tag = 'scratch operand']
  #allocation3 [shape = 'f32[36,256]{1,0:T(8,128)}', space=vmem, size = 0xa000, scoped, tag = 'scratch operand']
  #allocation4 [shape = 'f32[72,290]{1,0:T(8,128)}', space=vmem, size = 0x1b000, scoped, tag = 'scratch operand']
  %s0 = inlined_call_operand.vmem [shape: s32[2,256], index: 0, kind: input, shape index: {}]
  %s1 = inlined_call_operand.vmem [shape: f32[2,4,256], index: 1, kind: input, shape index: {}]
  %s2 = inlined_call_operand.vmem [shape: f32[72,36], index: 2, kind: input, shape index: {}]
  %s3 = inlined_call_operand.hbm [shape: f32[2,8,256], index: 3, kind: output, shape index: {}]
  %s4 = sld [smem:[#allocation0]]
  $region45: #{tpu_custom_call.1} parent=0
    _
  %s6 = ssub.s32 1, %s4
  %s7 = scalar_select 0, %s6, %s4
  $region1: #{tpu_custom_call.1} parent=0
    #allocation5 [shape = 'u8[16384]{0}', space=vmem, size = 0x4000, scoped, tag = 'output window, operand 0']
    #allocation6 [shape = 's32[2]{0}', space=sflag, size = 0x8, scoped, tag = 'scoped memory for tpu_custom_call.1']
    %8 = vsyncpa [#allocation6], 0
    %s9 = scalar_lea.sflag [#allocation6], 1
    %10 = vsyncpa %s9, 0
    loop: start=0, step=1, limit=4
    $region2: #{tpu_custom_call.1} parent=1 // loop_pre_header
      _
    $region3: #{tpu_custom_call.1} parent=1 // loop_header
      %s12 = sphi 0, %s16
      %p13 = scmp.ge.s32.totalorder %s12, 4
      %s20 = sphi 0, %s20
      %s22 = sphi 0, %s20
      %s23 = sphi 0, %s22
      %s37 = sphi 0, %s23
      %s43 = sphi 0, %s45
      %s46 = sphi 0, %s43
      %s47 = sphi 0, %s46
      %s63 = sphi 0, %s47
      %s67 = sphi 0, %s67
      %s69 = sphi 0, %s67
      %s70 = sphi 0, %s69
      %s84 = sphi 0, %s70
      %s90 = sphi 0, %s92
      %s93 = sphi 0, %s90
      %s94 = sphi 0, %s93
      %s110 = sphi 0, %s94
    $region4: #{tpu_custom_call.1} parent=1 // loop_header_branch
      %15 = sbr.rel (%p13) target = $region8
    $region5: #{tpu_custom_call.1} parent=1 // loop_body
      %s17 = ssub.s32 %s12, 1
      %s18 = ssub.s32 %s12, 2
      %s19 = sadd.s32 %s12, 1
      %s21 = sadd.s32 %s20, 1
      %p24 = scmp.eq.s32.totalorder %s12, 1
      %p25 = scmp.ne.s32.totalorder %s20, %s22
      %p26 = scmp.eq.s32.totalorder %s12, 0
      %p27 = por %p25, %p26
      %p28 = scmp.ne.s32.totalorder %s20, %s22
      %p29 = scmp.eq.s32.totalorder %s17, 1
      %p30 = por %p28, %p29
      %p31 = scmp.ne.s32.totalorder %s22, %s23
      %p32 = scmp.eq.s32.totalorder %s17, 0
      %p33 = por %p31, %p32
      %p34 = scmp.ne.s32.totalorder %s22, %s23
      %p35 = scmp.eq.s32.totalorder %s18, 1
      %p36 = por %p34, %p35
      %p38 = scmp.ne.s32.totalorder %s23, %s37
      %p39 = scmp.eq.s32.totalorder %s18, 0
      %p40 = por %p38, %p39
      %s41 = ssub.s32 %s12, %s19
      %p42 = scmp.eq.s32.totalorder %s41, 0
      %s44 = sadd.s32 %s43, 1
      %s45 = scalar_select %p42, %s43, %s44
      %p48 = pneg %p42
      %p49 = scmp.eq.s32.totalorder %s12, 1
      %p50 = por %p48, %p49
      %p51 = scmp.ne.s32.totalorder %s43, %s46
      %p52 = scmp.eq.s32.totalorder %s12, 0
      %p53 = por %p51, %p52
      %p54 = scmp.ne.s32.totalorder %s43, %s46
      %p55 = scmp.eq.s32.totalorder %s17, 1
      %p56 = por %p54, %p55
      %p57 = scmp.ne.s32.totalorder %s46, %s47
      %p58 = scmp.eq.s32.totalorder %s17, 0
      %p59 = por %p57, %p58
      %p60 = scmp.ne.s32.totalorder %s46, %s47
      %p61 = scmp.eq.s32.totalorder %s18, 1
      %p62 = por %p60, %p61
      %p64 = scmp.ne.s32.totalorder %s47, %s63
      %p65 = scmp.eq.s32.totalorder %s18, 0
      %p66 = por %p64, %p65
      %s68 = sadd.s32 %s67, 1
      %p71 = scmp.eq.s32.totalorder %s12, 1
      %p72 = scmp.ne.s32.totalorder %s67, %s69
      %p73 = scmp.eq.s32.totalorder %s12, 0
      %p74 = por %p72, %p73
      %p75 = scmp.ne.s32.totalorder %s67, %s69
      %p76 = scmp.eq.s32.totalorder %s17, 1
      %p77 = por %p75, %p76
      %p78 = scmp.ne.s32.totalorder %s69, %s70
      %p79 = scmp.eq.s32.totalorder %s17, 0
      %p80 = por %p78, %p79
      %p81 = scmp.ne.s32.totalorder %s69, %s70
      %p82 = scmp.eq.s32.totalorder %s18, 1
      %p83 = por %p81, %p82
      %p85 = scmp.ne.s32.totalorder %s70, %s84
      %p86 = scmp.eq.s32.totalorder %s18, 0
      %p87 = por %p85, %p86
      %s88 = ssub.s32 %s12, %s19
      %p89 = scmp.eq.s32.totalorder %s88, 0
      %s91 = sadd.s32 %s90, 1
      %s92 = scalar_select %p89, %s90, %s91
      %p95 = pneg %p89
      %p96 = scmp.eq.s32.totalorder %s12, 1
      %p97 = por %p95, %p96
      %p98 = scmp.ne.s32.totalorder %s90, %s93
      %p99 = scmp.eq.s32.totalorder %s12, 0
      %p100 = por %p98, %p99
      %p101 = scmp.ne.s32.totalorder %s90, %s93
      %p102 = scmp.eq.s32.totalorder %s17, 1
      %p103 = por %p101, %p102
      %p104 = scmp.ne.s32.totalorder %s93, %s94
      %p105 = scmp.eq.s32.totalorder %s17, 0
      %p106 = por %p104, %p105
      %p107 = scmp.ne.s32.totalorder %s93, %s94
      %p108 = scmp.eq.s32.totalorder %s18, 1
      %p109 = por %p107, %p108
      %p111 = scmp.ne.s32.totalorder %s94, %s110
      %p112 = scmp.eq.s32.totalorder %s18, 0
      %p113 = por %p111, %p112
      %p114 = scmp.le.s32.totalorder 1, %s12
      %p115 = scmp.lt.s32.totalorder %s12, 3
      %p116 = pnand %p114, %p115
      %p117 = pneg %p116
      // Predicated region
      $region9: #{tpu_custom_call.1} parent=5 // pred_check
        _
      $region10: #{tpu_custom_call.1} parent=5 // pred_check_branch
        %119 = sbr.rel (%p116) target = $region12
      $region11: #{tpu_custom_call.1} parent=5 // pred_region
        %s120 = ssub.s32 %s12, 1
        // Predicated region
        $region13: #{tpu_custom_call.1} parent=11 // pred_check
          %p121 = pneg %p33
        $region14: #{tpu_custom_call.1} parent=11 // pred_check_branch
          %123 = sbr.rel (%p121) target = $region16
        $region15: #{tpu_custom_call.1} parent=11 // pred_region
          _
        $region16: #{tpu_custom_call.1} parent=11 // pred_fallthru
          _
        // Predicated region
        $region17: #{tpu_custom_call.1} parent=11 // pred_check
          %p124 = pneg %p80
        $region18: #{tpu_custom_call.1} parent=11 // pred_check_branch
          %126 = sbr.rel (%p124) target = $region20
        $region19: #{tpu_custom_call.1} parent=11 // pred_region
          _
        $region20: #{tpu_custom_call.1} parent=11 // pred_fallthru
          _
      $region12: #{tpu_custom_call.1} parent=5 // pred_fallthru
        _
      %p127 = scmp.lt.s32.totalorder %s12, 2
      // Predicated region
      $region21: #{tpu_custom_call.1} parent=5 // pred_check
        %p128 = pneg %p127
      $region22: #{tpu_custom_call.1} parent=5 // pred_check_branch
        %130 = sbr.rel (%p128) target = $region24
      $region23: #{tpu_custom_call.1} parent=5 // pred_region
        // Predicated region
        $region25: #{tpu_custom_call.1} parent=23 // pred_check
          %p131 = pneg %p53
        $region26: #{tpu_custom_call.1} parent=23 // pred_check_branch
          %133 = sbr.rel (%p131) target = $region28
        $region27: #{tpu_custom_call.1} parent=23 // pred_region
          %p134 = scmp.lt.s32.totalorder %s12, 1
          %s135 = scalar_select %p134, %s12, 1
          %s136 = smul.addr %s135, 2
          %s137 = smul.addr %s136, 4
          %s138 = scalar_lea.vmem %s1, %s137
        $region28: #{tpu_custom_call.1} parent=23 // pred_fallthru
          _
      $region24: #{tpu_custom_call.1} parent=5 // pred_fallthru
        _
      %p139 = scmp.le.s32.totalorder 1, %s12
      %p140 = scmp.lt.s32.totalorder %s12, 3
      %p141 = pnand %p139, %p140
      %p142 = pneg %p141
      // Predicated region
      $region29: #{tpu_custom_call.1} parent=5 // pred_check
        _
      $region30: #{tpu_custom_call.1} parent=5 // pred_check_branch
        %144 = sbr.rel (%p141) target = $region32
      $region31: #{tpu_custom_call.1} parent=5 // pred_region
        %s145 = ssub.s32 %s12, 1
        %p146 = pneg %p33
        %p147 = pneg %p30
        %p148 = scmp.lt.s32.totalorder %s17, 1
        %s149 = scalar_select %p148, %s17, 1
        %s150 = smul.addr %s149, 2
        %s151 = smul.addr %s150, 4
        %s152 = scalar_lea.vmem %s1, %s151
        %p153 = pneg %p59
        %p154 = pneg %p56
        %p155 = pneg %p80
        %p156 = pneg %p77
        %p157 = pneg %p106
        %p158 = pneg %p103
        %s159 = sand.u32 %s93, 1
        %s160 = scalar_lea.sflag [#allocation6], %s159
        %s161 = sand.u32 %s93, 1
        %s162 = smul.addr %s161, 16
        %s163 = scalar_lea.vmem [#allocation5], %s162
        %p164 = scmp.lt.s32.totalorder %s17, 1
        %s165 = scalar_select %p164, %s17, 1
        %s166 = smul.addr %s165, 2
        %s167 = smul.addr %s166, 4
        %s168 = scalar_lea.vmem %s1, %s167
        %v169 = vld [vmem:[%s0] ss:$2 sm:$0x3]
        %s170 = scalar_lea.vmem %s0, 1
        %v171 = vld [vmem:[%s170] ss:$2 sm:$0x3]
        %vm172 = vcmp.eq.s32.totalorder %v169, 0
        %vm173 = vcmp.eq.s32.totalorder %v169, 15
        %vm174 = vcmp.eq.s32.totalorder %v171, 0
        %vm175 = vcmp.eq.s32.totalorder %v171, 15
        %vm176 = vcmask 134144
        %177 = vst.msk [vmem:[#allocation2] sm:$0xf] %vm176, 0.0
        %vm178 = vcmask 273544
        %179 = vst.msk [vmem:[#allocation2 + $0x8] sm:$0xf] %vm178, 0.0
        %v180 = vld [vmem:[%s168] sm:$0xff]
        %182 = vrot.lane.b32.xlu0 %v180, 17
        %v183 = vpop.permute.xlu0 %182
        %v184 = vrot.slane %v183, 4
        %vm185 = vcmask 138240
        %v186 = vsel %vm185, %v184, %v183
        %vm189 = vcmask 1043592
        %vm190 = vcmask 1047556
        %vm191 = vmor %vm190, %vm189
        %192 = vst.msk [vmem:[#allocation2] sm:$0xff] %vm191, %v186
        %193 = vst.msk [vmem:[#allocation2 + $0x8] sm:$0xf] %vm176, %v184
        %v194 = vld [vmem:[#allocation2] sm:$0xff]
        %v195 = vld [vmem:[#allocation2 + $0x8] sm:$0xf]
        %v196 = vsel %vm172, 1, 0
        %v197 = vperm.slane %v196, 0
        %v198 = vperm.slane %v196, 1
        %vm199 = vcmp.eq.s32.totalorder %v197, 1
        %vm200 = vcmp.eq.s32.totalorder %v198, 1
        %203 = vst [vmem:[#allocation1] ss:$2 sm:$0xff] %v194
        %s204 = scalar_lea.vmem [#allocation1], 16
        %205 = vst [vmem:[%s204] ss:$2 sm:$0xff] %v195
        %v206 = vld.sshfl [vmem:[#allocation1] sm:$0xff pattern:$0x75316420]
        %v207 = vld.sshfl [vmem:[#allocation1 + $0x8] sm:$0xff pattern:$0x75316420]
        %v208 = vld.sshfl [vmem:[#allocation1 + $0x10] sm:$0xff pattern:$0x75316420]
        %209 = vrot.lane.b32.xlu0 %v206, 96
        %v210 = vpop.permute.xlu0 %209
        %211 = vrot.lane.b32.xlu0 %v207, 96
        %v212 = vpop.permute.xlu0 %211
        %213 = vrot.lane.b32.xlu0 %v208, 96
        %v214 = vpop.permute.xlu0 %213
        %vm215 = vcmask 785408
        %v216 = vsel %vm215, %v210, %v212
        %v217 = vsel %vm215, %v212, %v214
        %220 = vst [vmem:[#allocation1] ss:$2 sm:$0xff] %v194
        %v221 = vld.sshfl [vmem:[#allocation1] sm:$0xff pattern:$0x75316420]
        %v222 = vld.sshfl [vmem:[#allocation1 + $0x8] sm:$0xff pattern:$0x75316420]
        %v225 = vsel %vm199, %v216, %v221
        %v226 = vsel %vm200, %v217, %v222
        %227 = vst [vmem:[#allocation1] ss:$2 sm:$0xff] %v194
        %s228 = scalar_lea.vmem [#allocation1], 16
        %229 = vst [vmem:[%s228] ss:$2 sm:$0xff] %v195
        %v230 = vld.sshfl [vmem:[#allocation1] sm:$0xff pattern:$0x75316420]
        %v231 = vld.sshfl [vmem:[#allocation1 + $0x8] sm:$0xff pattern:$0x75316420]
        %v232 = vld.sshfl [vmem:[#allocation1 + $0x10] sm:$0xff pattern:$0x75316420]
        %233 = vrot.lane.b32.xlu0 %v230, 94
        %v234 = vpop.permute.xlu0 %233
        %235 = vrot.lane.b32.xlu0 %v231, 94
        %v236 = vpop.permute.xlu0 %235
        %237 = vrot.lane.b32.xlu0 %v232, 94
        %v238 = vpop.permute.xlu0 %237
        %vm239 = vcmask 769024
        %v240 = vsel %vm239, %v234, %v236
        %v241 = vsel %vm239, %v236, %v238
        %244 = vst [vmem:[#allocation1] ss:$2 sm:$0xff] %v194
        %s245 = scalar_lea.vmem [#allocation1], 16
        %246 = vst [vmem:[%s245] ss:$2 sm:$0xff] %v195
        %v247 = vld.sshfl [vmem:[#allocation1] sm:$0xff pattern:$0x75316420]
        %v248 = vld.sshfl [vmem:[#allocation1 + $0x8] sm:$0xff pattern:$0x75316420]
        %v249 = vld.sshfl [vmem:[#allocation1 + $0x10] sm:$0xff pattern:$0x75316420]
        %250 = vrot.lane.b32.xlu0 %v247, 126
        %v251 = vpop.permute.xlu0 %250
        %252 = vrot.lane.b32.xlu0 %v248, 126
        %v253 = vpop.permute.xlu0 %252
        %254 = vrot.lane.b32.xlu0 %v249, 126
        %v255 = vpop.permute.xlu0 %254
        %vm256 = vcmask 1031168
        %v257 = vsel %vm256, %v251, %v253
        %v258 = vsel %vm256, %v253, %v255
        %v261 = vsel %vm199, %v240, %v257
        %v262 = vsel %vm200, %v241, %v258
        %v263 = vsel %vm174, 1, 0
        %v264 = vperm.slane %v263, 0
        %v265 = vperm.slane %v263, 1
        %vm266 = vcmp.eq.s32.totalorder %v264, 1
        %vm267 = vcmp.eq.s32.totalorder %v265, 1
        %v268 = vsel %vm266, %v261, %v225
        %v269 = vsel %vm267, %v262, %v226
        %270 = vst [vmem:[#allocation3] sm:$0xf] %v268
        %271 = vst [vmem:[#allocation3 + $0x8] sm:$0xf] %v269
        %272 = vst [vmem:[#allocation1] ss:$2 sm:$0xff] %v194
        %s273 = scalar_lea.vmem [#allocation1], 16
        %274 = vst [vmem:[%s273] ss:$2 sm:$0xff] %v195
        %v275 = vld.sshfl [vmem:[#allocation1] sm:$0xff pattern:$0x75316420]
        %v276 = vld.sshfl [vmem:[#allocation1 + $0x8] sm:$0xff pattern:$0x75316420]
        %v277 = vld.sshfl [vmem:[#allocation1 + $0x10] sm:$0xff pattern:$0x75316420]
        %278 = vrot.lane.b32.xlu0 %v275, 95
        %v279 = vpop.permute.xlu0 %278
        %280 = vrot.lane.b32.xlu0 %v276, 95
        %v281 = vpop.permute.xlu0 %280
        %282 = vrot.lane.b32.xlu0 %v277, 95
        %v283 = vpop.permute.xlu0 %282
        %vm284 = vcmask 777216
        %v285 = vsel %vm284, %v279, %v281
        %v286 = vsel %vm284, %v281, %v283
        %289 = vst [vmem:[#allocation1] ss:$2 sm:$0xff] %v194
        %s290 = scalar_lea.vmem [#allocation1], 16
        %291 = vst [vmem:[%s290] ss:$2 sm:$0xff] %v195
        %v292 = vld.sshfl [vmem:[#allocation1] sm:$0xff pattern:$0x75316420]
        %v293 = vld.sshfl [vmem:[#allocation1 + $0x8] sm:$0xff pattern:$0x75316420]
        %v294 = vld.sshfl [vmem:[#allocation1 + $0x10] sm:$0xff pattern:$0x75316420]
        %295 = vrot.lane.b32.xlu0 %v292, 127
        %v296 = vpop.permute.xlu0 %295
        %297 = vrot.lane.b32.xlu0 %v293, 127
        %v298 = vpop.permute.xlu0 %297
        %299 = vrot.lane.b32.xlu0 %v294, 127
        %v300 = vpop.permute.xlu0 %299
        %vm301 = vcmask 1039360
        %v302 = vsel %vm301, %v296, %v298
        %v303 = vsel %vm301, %v298, %v300
        %v306 = vsel %vm199, %v285, %v302
        %v307 = vsel %vm200, %v286, %v303
        %v310 = vrot.slane %v306, 4
        %v311 = vrot.slane %v307, 4
        %314 = vst [vmem:[#allocation3] sm:$0xf0] %v310
        %315 = vst [vmem:[#allocation3 + $0x8] sm:$0xf0] %v311
        %v316 = vsel %vm175, 1, 0
        %v317 = vperm.slane %v316, 0
        %v318 = vperm.slane %v316, 1
        %vm319 = vcmp.eq.s32.totalorder %v317, 1
        %vm320 = vcmp.eq.s32.totalorder %v318, 1
        %v321 = vsel %vm319, %v225, %v261
        %v322 = vsel %vm320, %v226, %v262
        %323 = vst [vmem:[#allocation3 + $0x10] sm:$0xf] %v321
        %324 = vst [vmem:[#allocation3 + $0x18] sm:$0xf] %v322
        %325 = vst [vmem:[#allocation1] ss:$2 sm:$0xff] %v194
        %s326 = scalar_lea.vmem [#allocation1], 16
        %327 = vst [vmem:[%s326] ss:$2 sm:$0xff] %v195
        %v328 = vld.sshfl [vmem:[#allocation1] sm:$0xff pattern:$0x75316420]
        %v329 = vld.sshfl [vmem:[#allocation1 + $0x8] sm:$0xff pattern:$0x75316420]
        %v330 = vld.sshfl [vmem:[#allocation1 + $0x10] sm:$0xff pattern:$0x75316420]
        %331 = vrot.lane.b32.xlu0 %v328, 110
        %v332 = vpop.permute.xlu0 %331
        %333 = vrot.lane.b32.xlu0 %v329, 110
        %v334 = vpop.permute.xlu0 %333
        %335 = vrot.lane.b32.xlu0 %v330, 110
        %v336 = vpop.permute.xlu0 %335
        %vm337 = vcmask 900096
        %v338 = vsel %vm337, %v332, %v334
        %v339 = vsel %vm337, %v334, %v336
        %342 = vst [vmem:[#allocation1] ss:$2 sm:$0xff] %v194
        %s343 = scalar_lea.vmem [#allocation1], 16
        %344 = vst [vmem:[%s343] ss:$2 sm:$0xff] %v195
        %v345 = vld.sshfl [vmem:[#allocation1] sm:$0xff pattern:$0x75316420]
        %v346 = vld.sshfl [vmem:[#allocation1 + $0x8] sm:$0xff pattern:$0x75316420]
        %v347 = vld.sshfl [vmem:[#allocation1 + $0x10] sm:$0xff pattern:$0x75316420]
        %348 = vrot.lane.b32.xlu0 %v345, 112
        %v349 = vpop.permute.xlu0 %348
        %350 = vrot.lane.b32.xlu0 %v346, 112
        %v351 = vpop.permute.xlu0 %350
        %352 = vrot.lane.b32.xlu0 %v347, 112
        %v353 = vpop.permute.xlu0 %352
        %vm354 = vcmask 916480
        %v355 = vsel %vm354, %v349, %v351
        %v356 = vsel %vm354, %v351, %v353
        %v359 = vsel %vm266, %v338, %v355
        %v360 = vsel %vm267, %v339, %v356
        %v363 = vrot.slane %v359, 4
        %v364 = vrot.slane %v360, 4
        %367 = vst [vmem:[#allocation3 + $0x10] sm:$0xf0] %v363
        %368 = vst [vmem:[#allocation3 + $0x18] sm:$0xf0] %v364
        %369 = vst [vmem:[#allocation1] ss:$2 sm:$0xff] %v194
        %s370 = scalar_lea.vmem [#allocation1], 16
        %371 = vst [vmem:[%s370] ss:$2 sm:$0xff] %v195
        %v372 = vld.sshfl [vmem:[#allocation1] sm:$0xff pattern:$0x75316420]
        %v373 = vld.sshfl [vmem:[#allocation1 + $0x8] sm:$0xff pattern:$0x75316420]
        %v374 = vld.sshfl [vmem:[#allocation1 + $0x10] sm:$0xff pattern:$0x75316420]
        %375 = vrot.lane.b32.xlu0 %v372, 111
        %v376 = vpop.permute.xlu0 %375
        %377 = vrot.lane.b32.xlu0 %v373, 111
        %v378 = vpop.permute.xlu0 %377
        %379 = vrot.lane.b32.xlu0 %v374, 111
        %v380 = vpop.permute.xlu0 %379
        %vm381 = vcmask 908288
        %v382 = vsel %vm381, %v376, %v378
        %v383 = vsel %vm381, %v378, %v380
        %386 = vst [vmem:[#allocation3 + $0x20] sm:$0xf] %v382
        %387 = vst [vmem:[#allocation3 + $0x28] sm:$0xf] %v383
        %388 = vst [vmem:[#allocation1] ss:$2 sm:$0xff] %v194
        %s389 = scalar_lea.vmem [#allocation1], 16
        %390 = vst [vmem:[%s389] ss:$2 sm:$0xff] %v195
        %v391 = vld.sshfl [vmem:[#allocation1] sm:$0xff pattern:$0x75316420]
        %v392 = vld.sshfl [vmem:[#allocation1 + $0x8] sm:$0xff pattern:$0x75316420]
        %v393 = vld.sshfl [vmem:[#allocation1 + $0x10] sm:$0xff pattern:$0x75316420]
        %394 = vrot.lane.b32.xlu0 %v391, 112
        %v395 = vpop.permute.xlu0 %394
        %396 = vrot.lane.b32.xlu0 %v392, 112
        %v397 = vpop.permute.xlu0 %396
        %398 = vrot.lane.b32.xlu0 %v393, 112
        %v399 = vpop.permute.xlu0 %398
        %v400 = vsel %vm354, %v395, %v397
        %v401 = vsel %vm354, %v397, %v399
        %404 = vst [vmem:[#allocation1] ss:$2 sm:$0xff] %v194
        %s405 = scalar_lea.vmem [#allocation1], 16
        %406 = vst [vmem:[%s405] ss:$2 sm:$0xff] %v195
        %v407 = vld.sshfl [vmem:[#allocation1] sm:$0xff pattern:$0x75316420]
        %v408 = vld.sshfl [vmem:[#allocation1 + $0x8] sm:$0xff pattern:$0x75316420]
        %v409 = vld.sshfl [vmem:[#allocation1 + $0x10] sm:$0xff pattern:$0x75316420]
        %410 = vrot.lane.b32.xlu0 %v407, 110
        %v411 = vpop.permute.xlu0 %410
        %412 = vrot.lane.b32.xlu0 %v408, 110
        %v413 = vpop.permute.xlu0 %412
        %414 = vrot.lane.b32.xlu0 %v409, 110
        %v415 = vpop.permute.xlu0 %414
        %v416 = vsel %vm337, %v411, %v413
        %v417 = vsel %vm337, %v413, %v415
        %v420 = vsel %vm319, %v400, %v416
        %v421 = vsel %vm320, %v401, %v417
        %v424 = vrot.slane %v420, 4
        %v425 = vrot.slane %v421, 4
        %428 = vst [vmem:[#allocation3 + $0x20] sm:$0xf0] %v424
        %429 = vst [vmem:[#allocation3 + $0x28] sm:$0xf0] %v425
        %v430 = vsel %vm173, 1, 0
        %v431 = vperm.slane %v430, 0
        %v432 = vperm.slane %v430, 1
        %vm433 = vcmp.eq.s32.totalorder %v431, 1
        %vm434 = vcmp.eq.s32.totalorder %v432, 1
        %435 = vst [vmem:[#allocation1] ss:$2 sm:$0xff] %v194
        %v436 = vld.sshfl [vmem:[#allocation1] sm:$0xff pattern:$0x75316420]
        %v437 = vld.sshfl [vmem:[#allocation1 + $0x8] sm:$0xff pattern:$0x75316420]
        %440 = vst [vmem:[#allocation1] ss:$2 sm:$0xff] %v194
        %s441 = scalar_lea.vmem [#allocation1], 16
        %442 = vst [vmem:[%s441] ss:$2 sm:$0xff] %v195
        %v443 = vld.sshfl [vmem:[#allocation1] sm:$0xff pattern:$0x75316420]
        %v444 = vld.sshfl [vmem:[#allocation1 + $0x8] sm:$0xff pattern:$0x75316420]
        %v445 = vld.sshfl [vmem:[#allocation1 + $0x10] sm:$0xff pattern:$0x75316420]
        %446 = vrot.lane.b32.xlu0 %v443, 96
        %v447 = vpop.permute.xlu0 %446
        %448 = vrot.lane.b32.xlu0 %v444, 96
        %v449 = vpop.permute.xlu0 %448
        %450 = vrot.lane.b32.xlu0 %v445, 96
        %v451 = vpop.permute.xlu0 %450
        %v452 = vsel %vm215, %v447, %v449
        %v453 = vsel %vm215, %v449, %v451
        %v456 = vsel %vm433, %v436, %v452
        %v457 = vsel %vm434, %v437, %v453
        %458 = vst [vmem:[#allocation1] ss:$2 sm:$0xff] %v194
        %s459 = scalar_lea.vmem [#allocation1], 16
        %460 = vst [vmem:[%s459] ss:$2 sm:$0xff] %v195
        %v461 = vld.sshfl [vmem:[#allocation1] sm:$0xff pattern:$0x75316420]
        %v462 = vld.sshfl [vmem:[#allocation1 + $0x8] sm:$0xff pattern:$0x75316420]
        %v463 = vld.sshfl [vmem:[#allocation1 + $0x10] sm:$0xff pattern:$0x75316420]
        %464 = vrot.lane.b32.xlu0 %v461, 126
        %v465 = vpop.permute.xlu0 %464
        %466 = vrot.lane.b32.xlu0 %v462, 126
        %v467 = vpop.permute.xlu0 %466
        %468 = vrot.lane.b32.xlu0 %v463, 126
        %v469 = vpop.permute.xlu0 %468
        %v470 = vsel %vm256, %v465, %v467
        %v471 = vsel %vm256, %v467, %v469
        %474 = vst [vmem:[#allocation1] ss:$2 sm:$0xff] %v194
        %s475 = scalar_lea.vmem [#allocation1], 16
        %476 = vst [vmem:[%s475] ss:$2 sm:$0xff] %v195
        %v477 = vld.sshfl [vmem:[#allocation1] sm:$0xff pattern:$0x75316420]
        %v478 = vld.sshfl [vmem:[#allocation1 + $0x8] sm:$0xff pattern:$0x75316420]
        %v479 = vld.sshfl [vmem:[#allocation1 + $0x10] sm:$0xff pattern:$0x75316420]
        %480 = vrot.lane.b32.xlu0 %v477, 94
        %v481 = vpop.permute.xlu0 %480
        %482 = vrot.lane.b32.xlu0 %v478, 94
        %v483 = vpop.permute.xlu0 %482
        %484 = vrot.lane.b32.xlu0 %v479, 94
        %v485 = vpop.permute.xlu0 %484
        %v486 = vsel %vm239, %v481, %v483
        %v487 = vsel %vm239, %v483, %v485
        %v490 = vsel %vm433, %v470, %v486
        %v491 = vsel %vm434, %v471, %v487
        %v492 = vsel %vm266, %v490, %v456
        %v493 = vsel %vm267, %v491, %v457
        %494 = vst [vmem:[#allocation3 + $0x30] sm:$0xf] %v492
        %495 = vst [vmem:[#allocation3 + $0x38] sm:$0xf] %v493
        %496 = vst [vmem:[#allocation1] ss:$2 sm:$0xff] %v194
        %s497 = scalar_lea.vmem [#allocation1], 16
        %498 = vst [vmem:[%s497] ss:$2 sm:$0xff] %v195
        %v499 = vld.sshfl [vmem:[#allocation1] sm:$0xff pattern:$0x75316420]
        %v500 = vld.sshfl [vmem:[#allocation1 + $0x8] sm:$0xff pattern:$0x75316420]
        %v501 = vld.sshfl [vmem:[#allocation1 + $0x10] sm:$0xff pattern:$0x75316420]
        %502 = vrot.lane.b32.xlu0 %v499, 127
        %v503 = vpop.permute.xlu0 %502
        %504 = vrot.lane.b32.xlu0 %v500, 127
        %v505 = vpop.permute.xlu0 %504
        %506 = vrot.lane.b32.xlu0 %v501, 127
        %v507 = vpop.permute.xlu0 %506
        %v508 = vsel %vm301, %v503, %v505
        %v509 = vsel %vm301, %v505, %v507
        %512 = vst [vmem:[#allocation1] ss:$2 sm:$0xff] %v194
        %s513 = scalar_lea.vmem [#allocation1], 16
        %514 = vst [vmem:[%s513] ss:$2 sm:$0xff] %v195
        %v515 = vld.sshfl [vmem:[#allocation1] sm:$0xff pattern:$0x75316420]
        %v516 = vld.sshfl [vmem:[#allocation1 + $0x8] sm:$0xff pattern:$0x75316420]
        %v517 = vld.sshfl [vmem:[#allocation1 + $0x10] sm:$0xff pattern:$0x75316420]
        %518 = vrot.lane.b32.xlu0 %v515, 95
        %v519 = vpop.permute.xlu0 %518
        %520 = vrot.lane.b32.xlu0 %v516, 95
        %v521 = vpop.permute.xlu0 %520
        %522 = vrot.lane.b32.xlu0 %v517, 95
        %v523 = vpop.permute.xlu0 %522
        %v524 = vsel %vm284, %v519, %v521
        %v525 = vsel %vm284, %v521, %v523
        %v528 = vsel %vm433, %v508, %v524
        %v529 = vsel %vm434, %v509, %v525
        %v532 = vrot.slane %v528, 4
        %v533 = vrot.slane %v529, 4
        %536 = vst [vmem:[#allocation3 + $0x30] sm:$0xf0] %v532
        %537 = vst [vmem:[#allocation3 + $0x38] sm:$0xf0] %v533
        %v538 = vsel %vm319, %v456, %v490
        %v539 = vsel %vm320, %v457, %v491
        %540 = vst [vmem:[#allocation3 + $0x40] sm:$0xf] %v538
        %541 = vst [vmem:[#allocation3 + $0x48] sm:$0xf] %v539
        %v542 = vld [vmem:[%s2] sm:$0xff]
        %v543 = vld [vmem:[%s2 + $0x8] sm:$0xff]
        %v544 = vld [vmem:[%s2 + $0x10] sm:$0xff]
        %v545 = vld [vmem:[%s2 + $0x18] sm:$0xff]
        %v546 = vld [vmem:[%s2 + $0x20] sm:$0xff]
        %v547 = vld [vmem:[%s2 + $0x28] sm:$0xff]
        %v548 = vld [vmem:[%s2 + $0x30] sm:$0xff]
        %v549 = vld [vmem:[%s2 + $0x38] sm:$0xff]
        %v550 = vld [vmem:[%s2 + $0x40] sm:$0xff]
        %v551 = vld [vmem:[#allocation3] sm:$0xff]
        %v552 = vld [vmem:[#allocation3 + $0x8] sm:$0xff]
        %v553 = vld [vmem:[#allocation3 + $0x10] sm:$0xff]
        %v554 = vld [vmem:[#allocation3 + $0x18] sm:$0xff]
        %v555 = vld [vmem:[#allocation3 + $0x20] sm:$0xff]
        %v556 = vld [vmem:[#allocation3 + $0x28] sm:$0xff]
        %v557 = vld [vmem:[#allocation3 + $0x30] sm:$0xff]
        %v558 = vld [vmem:[#allocation3 + $0x38] sm:$0xff]
        %v559 = vld [vmem:[#allocation3 + $0x40] sm:$0xf]
        %v560 = vld [vmem:[#allocation3 + $0x48] sm:$0xf]
        %vm561 = vcmask 293888
        %v563 = vsel %vm561, %v542, 0
        %v566 = vsel %vm561, %v543, 0
        %v569 = vsel %vm561, %v544, 0
        %v572 = vsel %vm561, %v545, 0
        %v575 = vsel %vm561, %v546, 0
        %v578 = vsel %vm561, %v547, 0
        %v581 = vsel %vm561, %v548, 0
        %v584 = vsel %vm561, %v549, 0
        %v587 = vsel %vm561, %v550, 0
        %vm589 = vcmask 1043456
        %v591 = vsel %vm589, %v559, 0
        %v594 = vsel %vm589, %v560, 0
        %596 = vmatpush.msra.mxu0 0.0
        %597 = vmatpush.msra.mxu0 0.0
        %598 = vmatpush.msra.mxu0 0.0
        %599 = vmatpush.msra.mxu0 0.0
        %600 = vmatpush.msra.mxu0 0.0
        %601 = vmatpush.msra.mxu0 0.0
        %602 = vmatpush.msra.mxu0 0.0
        %603 = vmatpush.msra.mxu0 0.0
        %604 = vmatpush.msra.mxu0 0.0
        %605 = vmatpush.msra.mxu0 0.0
        %606 = vmatpush.msra.mxu0 0.0
        %607 = vmatpush.msra.mxu0 %v591
        %608 = vmatpush.msra.mxu0 %v557
        %609 = vmatpush.msra.mxu0 %v555
        %610 = vmatpush.msra.mxu0 %v553
        %611 = vmatpush.msra.mxu0 %v551
        %612 = vmatmul.f32.gmra.mxu0 %v563
        %v613 = vpop.f32.mrf.mxu0
        %v614 = vadd.f32 0.0, %v613
        %615 = vmatmul.f32.gmra.mxu0 %v566
        %v616 = vpop.f32.mrf.mxu0
        %v617 = vadd.f32 0.0, %v616
        %618 = vmatmul.f32.gmra.mxu0 %v569
        %v619 = vpop.f32.mrf.mxu0
        %v620 = vadd.f32 0.0, %v619
        %621 = vmatmul.f32.gmra.mxu0 %v572
        %v622 = vpop.f32.mrf.mxu0
        %v623 = vadd.f32 0.0, %v622
        %624 = vmatmul.f32.gmra.mxu0 %v575
        %v625 = vpop.f32.mrf.mxu0
        %v626 = vadd.f32 0.0, %v625
        %627 = vmatmul.f32.gmra.mxu0 %v578
        %v628 = vpop.f32.mrf.mxu0
        %v629 = vadd.f32 0.0, %v628
        %630 = vmatmul.f32.gmra.mxu0 %v581
        %v631 = vpop.f32.mrf.mxu0
        %v632 = vadd.f32 0.0, %v631
        %633 = vmatmul.f32.gmra.mxu0 %v584
        %v634 = vpop.f32.mrf.mxu0
        %v635 = vadd.f32 0.0, %v634
        %636 = vmatmul.f32.gmra.mxu0 %v587
        %v637 = vpop.f32.mrf.mxu0
        %v638 = vadd.f32 0.0, %v637
        %639 = vdwg.mxu0
        %640 = vmatpush.msra.mxu0 0.0
        %641 = vmatpush.msra.mxu0 0.0
        %642 = vmatpush.msra.mxu0 0.0
        %643 = vmatpush.msra.mxu0 0.0
        %644 = vmatpush.msra.mxu0 0.0
        %645 = vmatpush.msra.mxu0 0.0
        %646 = vmatpush.msra.mxu0 0.0
        %647 = vmatpush.msra.mxu0 0.0
        %648 = vmatpush.msra.mxu0 0.0
        %649 = vmatpush.msra.mxu0 0.0
        %650 = vmatpush.msra.mxu0 0.0
        %651 = vmatpush.msra.mxu0 %v594
        %652 = vmatpush.msra.mxu0 %v558
        %653 = vmatpush.msra.mxu0 %v556
        %654 = vmatpush.msra.mxu0 %v554
        %655 = vmatpush.msra.mxu0 %v552
        %656 = vmatmul.f32.gmra.mxu0 %v563
        %v657 = vpop.f32.mrf.mxu0
        %v658 = vadd.f32 0.0, %v657
        %659 = vmatmul.f32.gmra.mxu0 %v566
        %v660 = vpop.f32.mrf.mxu0
        %v661 = vadd.f32 0.0, %v660
        %662 = vmatmul.f32.gmra.mxu0 %v569
        %v663 = vpop.f32.mrf.mxu0
        %v664 = vadd.f32 0.0, %v663
        %665 = vmatmul.f32.gmra.mxu0 %v572
        %v666 = vpop.f32.mrf.mxu0
        %v667 = vadd.f32 0.0, %v666
        %668 = vmatmul.f32.gmra.mxu0 %v575
        %v669 = vpop.f32.mrf.mxu0
        %v670 = vadd.f32 0.0, %v669
        %671 = vmatmul.f32.gmra.mxu0 %v578
        %v672 = vpop.f32.mrf.mxu0
        %v673 = vadd.f32 0.0, %v672
        %674 = vmatmul.f32.gmra.mxu0 %v581
        %v675 = vpop.f32.mrf.mxu0
        %v676 = vadd.f32 0.0, %v675
        %677 = vmatmul.f32.gmra.mxu0 %v584
        %v678 = vpop.f32.mrf.mxu0
        %v679 = vadd.f32 0.0, %v678
        %680 = vmatmul.f32.gmra.mxu0 %v587
        %v681 = vpop.f32.mrf.mxu0
        %v682 = vadd.f32 0.0, %v681
        %683 = vdwg.mxu0
        %684 = vst.msk [vmem:[#allocation4] sm:$0xff] %vm185, 0.0
        %685 = vst.msk [vmem:[#allocation4 + $0x18] sm:$0xff] %vm185, 0.0
        %686 = vst.msk [vmem:[#allocation4 + $0x30] sm:$0xff] %vm185, 0.0
        %687 = vst.msk [vmem:[#allocation4 + $0x48] sm:$0xff] %vm185, 0.0
        %688 = vst.msk [vmem:[#allocation4 + $0x60] sm:$0xff] %vm185, 0.0
        %689 = vst.msk [vmem:[#allocation4 + $0x78] sm:$0xff] %vm185, 0.0
        %690 = vst.msk [vmem:[#allocation4 + $0x90] sm:$0xff] %vm185, 0.0
        %691 = vst.msk [vmem:[#allocation4 + $0xa8] sm:$0xff] %vm185, 0.0
        %692 = vst.msk [vmem:[#allocation4 + $0xc0] sm:$0xff] %vm185, 0.0
        %vm693 = vcmask 277640
        %694 = vst.msk [vmem:[#allocation4 + $0x10] sm:$0xff] %vm693, 0.0
        %695 = vst.msk [vmem:[#allocation4 + $0x28] sm:$0xff] %vm693, 0.0
        %696 = vst.msk [vmem:[#allocation4 + $0x40] sm:$0xff] %vm693, 0.0
        %697 = vst.msk [vmem:[#allocation4 + $0x58] sm:$0xff] %vm693, 0.0
        %698 = vst.msk [vmem:[#allocation4 + $0x70] sm:$0xff] %vm693, 0.0
        %699 = vst.msk [vmem:[#allocation4 + $0x88] sm:$0xff] %vm693, 0.0
        %700 = vst.msk [vmem:[#allocation4 + $0xa0] sm:$0xff] %vm693, 0.0
        %701 = vst.msk [vmem:[#allocation4 + $0xb8] sm:$0xff] %vm693, 0.0
        %702 = vst.msk [vmem:[#allocation4 + $0xd0] sm:$0xff] %vm693, 0.0
        %721 = vrot.lane.b32.xlu0 %v614, 17
        %v722 = vpop.permute.xlu0 %721
        %723 = vrot.lane.b32.xlu0 %v658, 17
        %v724 = vpop.permute.xlu0 %723
        %725 = vrot.lane.b32.xlu0 %v617, 17
        %v726 = vpop.permute.xlu0 %725
        %727 = vrot.lane.b32.xlu0 %v661, 17
        %v728 = vpop.permute.xlu0 %727
        %729 = vrot.lane.b32.xlu0 %v620, 17
        %v730 = vpop.permute.xlu0 %729
        %731 = vrot.lane.b32.xlu0 %v664, 17
        %v732 = vpop.permute.xlu0 %731
        %733 = vrot.lane.b32.xlu0 %v623, 17
        %v734 = vpop.permute.xlu0 %733
        %735 = vrot.lane.b32.xlu0 %v667, 17
        %v736 = vpop.permute.xlu0 %735
        %737 = vrot.lane.b32.xlu0 %v626, 17
        %v738 = vpop.permute.xlu0 %737
        %739 = vrot.lane.b32.xlu0 %v670, 17
        %v740 = vpop.permute.xlu0 %739
        %741 = vrot.lane.b32.xlu0 %v629, 17
        %v742 = vpop.permute.xlu0 %741
        %743 = vrot.lane.b32.xlu0 %v673, 17
        %v744 = vpop.permute.xlu0 %743
        %745 = vrot.lane.b32.xlu0 %v632, 17
        %v746 = vpop.permute.xlu0 %745
        %747 = vrot.lane.b32.xlu0 %v676, 17
        %v748 = vpop.permute.xlu0 %747
        %749 = vrot.lane.b32.xlu0 %v635, 17
        %v750 = vpop.permute.xlu0 %749
        %751 = vrot.lane.b32.xlu0 %v679, 17
        %v752 = vpop.permute.xlu0 %751
        %753 = vrot.lane.b32.xlu0 %v638, 17
        %v754 = vpop.permute.xlu0 %753
        %755 = vrot.lane.b32.xlu0 %v682, 17
        %v756 = vpop.permute.xlu0 %755
        %v757 = vsel %vm185, %v722, %v724
        %v758 = vsel %vm185, %v726, %v728
        %v759 = vsel %vm185, %v730, %v732
        %v760 = vsel %vm185, %v734, %v736
        %v761 = vsel %vm185, %v738, %v740
        %v762 = vsel %vm185, %v742, %v744
        %v763 = vsel %vm185, %v746, %v748
        %v764 = vsel %vm185, %v750, %v752
        %v765 = vsel %vm185, %v754, %v756
        %vm793 = vcmask 1047688
        %794 = vst.msk [vmem:[#allocation4] sm:$0xff] %vm793, %v722
        %795 = vst [vmem:[#allocation4 + $0x8] sm:$0xff] %v757
        %796 = vst.msk [vmem:[#allocation4 + $0x10] sm:$0xff] %vm185, %v724
        %797 = vst.msk [vmem:[#allocation4 + $0x18] sm:$0xff] %vm793, %v726
        %798 = vst [vmem:[#allocation4 + $0x20] sm:$0xff] %v758
        %799 = vst.msk [vmem:[#allocation4 + $0x28] sm:$0xff] %vm185, %v728
        %800 = vst.msk [vmem:[#allocation4 + $0x30] sm:$0xff] %vm793, %v730
        %801 = vst [vmem:[#allocation4 + $0x38] sm:$0xff] %v759
        %802 = vst.msk [vmem:[#allocation4 + $0x40] sm:$0xff] %vm185, %v732
        %803 = vst.msk [vmem:[#allocation4 + $0x48] sm:$0xff] %vm793, %v734
        %804 = vst [vmem:[#allocation4 + $0x50] sm:$0xff] %v760
        %805 = vst.msk [vmem:[#allocation4 + $0x58] sm:$0xff] %vm185, %v736
        %806 = vst.msk [vmem:[#allocation4 + $0x60] sm:$0xff] %vm793, %v738
        %807 = vst [vmem:[#allocation4 + $0x68] sm:$0xff] %v761
        %808 = vst.msk [vmem:[#allocation4 + $0x70] sm:$0xff] %vm185, %v740
        %809 = vst.msk [vmem:[#allocation4 + $0x78] sm:$0xff] %vm793, %v742
        %810 = vst [vmem:[#allocation4 + $0x80] sm:$0xff] %v762
        %811 = vst.msk [vmem:[#allocation4 + $0x88] sm:$0xff] %vm185, %v744
        %812 = vst.msk [vmem:[#allocation4 + $0x90] sm:$0xff] %vm793, %v746
        %813 = vst [vmem:[#allocation4 + $0x98] sm:$0xff] %v763
        %814 = vst.msk [vmem:[#allocation4 + $0xa0] sm:$0xff] %vm185, %v748
        %815 = vst.msk [vmem:[#allocation4 + $0xa8] sm:$0xff] %vm793, %v750
        %816 = vst [vmem:[#allocation4 + $0xb0] sm:$0xff] %v764
        %817 = vst.msk [vmem:[#allocation4 + $0xb8] sm:$0xff] %vm185, %v752
        %818 = vst.msk [vmem:[#allocation4 + $0xc0] sm:$0xff] %vm793, %v754
        %819 = vst [vmem:[#allocation4 + $0xc8] sm:$0xff] %v765
        %820 = vst.msk [vmem:[#allocation4 + $0xd0] sm:$0xff] %vm185, %v756
        %v821 = vld [vmem:[#allocation4] sm:$0xff]
        %v822 = vld [vmem:[#allocation4 + $0x8] sm:$0xff]
        %v823 = vsel %vm199, 0.0, %v821
        %v824 = vsel %vm200, 0.0, %v822
        %v825 = vsel %vm266, 0.0, %v823
        %v826 = vsel %vm267, 0.0, %v824
        %v827 = vadd.f32 %v825, 0.0
        %v828 = vadd.f32 %v826, 0.0
        %v829 = vld [vmem:[#allocation4 + $0x18] sm:$0xff]
        %v830 = vld [vmem:[#allocation4 + $0x20] sm:$0xff]
        %v831 = vld [vmem:[#allocation4 + $0x28] sm:$0xff]
        %835 = vrot.lane.b32.xlu0 %v829, 127
        %v836 = vpop.permute.xlu0 %835
        %837 = vrot.lane.b32.xlu0 %v830, 127
        %v838 = vpop.permute.xlu0 %837
        %839 = vrot.lane.b32.xlu0 %v831, 127
        %v840 = vpop.permute.xlu0 %839
        %v841 = vsel %vm301, %v836, %v838
        %v842 = vsel %vm301, %v838, %v840
        %v845 = vsel %vm199, 0.0, %v841
        %v846 = vsel %vm200, 0.0, %v842
        %v847 = vadd.f32 %v827, %v845
        %v848 = vadd.f32 %v828, %v846
        %v849 = vld [vmem:[#allocation4 + $0x30] sm:$0xff]
        %v850 = vld [vmem:[#allocation4 + $0x38] sm:$0xff]
        %v851 = vld [vmem:[#allocation4 + $0x40] sm:$0xff]
        %855 = vrot.lane.b32.xlu0 %v849, 126
        %v856 = vpop.permute.xlu0 %855
        %857 = vrot.lane.b32.xlu0 %v850, 126
        %v858 = vpop.permute.xlu0 %857
        %859 = vrot.lane.b32.xlu0 %v851, 126
        %v860 = vpop.permute.xlu0 %859
        %v861 = vsel %vm256, %v856, %v858
        %v862 = vsel %vm256, %v858, %v860
        %v865 = vsel %vm199, 0.0, %v861
        %v866 = vsel %vm200, 0.0, %v862
        %v867 = vsel %vm319, 0.0, %v865
        %v868 = vsel %vm320, 0.0, %v866
        %v869 = vadd.f32 %v847, %v867
        %v870 = vadd.f32 %v848, %v868
        %v871 = vld [vmem:[#allocation4 + $0x48] sm:$0xff]
        %v872 = vld [vmem:[#allocation4 + $0x50] sm:$0xff]
        %v873 = vld [vmem:[#allocation4 + $0x58] sm:$0xff]
        %877 = vrot.lane.b32.xlu0 %v871, 112
        %v878 = vpop.permute.xlu0 %877
        %879 = vrot.lane.b32.xlu0 %v872, 112
        %v880 = vpop.permute.xlu0 %879
        %881 = vrot.lane.b32.xlu0 %v873, 112
        %v882 = vpop.permute.xlu0 %881
        %v883 = vsel %vm354, %v878, %v880
        %v884 = vsel %vm354, %v880, %v882
        %v887 = vsel %vm266, 0.0, %v883
        %v888 = vsel %vm267, 0.0, %v884
        %v889 = vadd.f32 %v869, %v887
        %v890 = vadd.f32 %v870, %v888
        %v891 = vld [vmem:[#allocation4 + $0x60] sm:$0xff]
        %v892 = vld [vmem:[#allocation4 + $0x68] sm:$0xff]
        %v893 = vld [vmem:[#allocation4 + $0x70] sm:$0xff]
        %897 = vrot.lane.b32.xlu0 %v891, 111
        %v898 = vpop.permute.xlu0 %897
        %899 = vrot.lane.b32.xlu0 %v892, 111
        %v900 = vpop.permute.xlu0 %899
        %901 = vrot.lane.b32.xlu0 %v893, 111
        %v902 = vpop.permute.xlu0 %901
        %v903 = vsel %vm381, %v898, %v900
        %v904 = vsel %vm381, %v900, %v902
        %v907 = vadd.f32 %v889, %v903
        %v908 = vadd.f32 %v890, %v904
        %v909 = vld [vmem:[#allocation4 + $0x78] sm:$0xff]
        %v910 = vld [vmem:[#allocation4 + $0x80] sm:$0xff]
        %v911 = vld [vmem:[#allocation4 + $0x88] sm:$0xff]
        %915 = vrot.lane.b32.xlu0 %v909, 110
        %v916 = vpop.permute.xlu0 %915
        %917 = vrot.lane.b32.xlu0 %v910, 110
        %v918 = vpop.permute.xlu0 %917
        %919 = vrot.lane.b32.xlu0 %v911, 110
        %v920 = vpop.permute.xlu0 %919
        %v921 = vsel %vm337, %v916, %v918
        %v922 = vsel %vm337, %v918, %v920
        %v925 = vsel %vm319, 0.0, %v921
        %v926 = vsel %vm320, 0.0, %v922
        %v927 = vadd.f32 %v907, %v925
        %v928 = vadd.f32 %v908, %v926
        %v929 = vld [vmem:[#allocation4 + $0x90] sm:$0xff]
        %v930 = vld [vmem:[#allocation4 + $0x98] sm:$0xff]
        %v931 = vld [vmem:[#allocation4 + $0xa0] sm:$0xff]
        %935 = vrot.lane.b32.xlu0 %v929, 96
        %v936 = vpop.permute.xlu0 %935
        %937 = vrot.lane.b32.xlu0 %v930, 96
        %v938 = vpop.permute.xlu0 %937
        %939 = vrot.lane.b32.xlu0 %v931, 96
        %v940 = vpop.permute.xlu0 %939
        %v941 = vsel %vm215, %v936, %v938
        %v942 = vsel %vm215, %v938, %v940
        %v945 = vsel %vm433, 0.0, %v941
        %v946 = vsel %vm434, 0.0, %v942
        %v947 = vsel %vm266, 0.0, %v945
        %v948 = vsel %vm267, 0.0, %v946
        %v949 = vadd.f32 %v927, %v947
        %v950 = vadd.f32 %v928, %v948
        %v951 = vld [vmem:[#allocation4 + $0xa8] sm:$0xff]
        %v952 = vld [vmem:[#allocation4 + $0xb0] sm:$0xff]
        %v953 = vld [vmem:[#allocation4 + $0xb8] sm:$0xff]
        %957 = vrot.lane.b32.xlu0 %v951, 95
        %v958 = vpop.permute.xlu0 %957
        %959 = vrot.lane.b32.xlu0 %v952, 95
        %v960 = vpop.permute.xlu0 %959
        %961 = vrot.lane.b32.xlu0 %v953, 95
        %v962 = vpop.permute.xlu0 %961
        %v963 = vsel %vm284, %v958, %v960
        %v964 = vsel %vm284, %v960, %v962
        %v967 = vsel %vm433, 0.0, %v963
        %v968 = vsel %vm434, 0.0, %v964
        %v969 = vadd.f32 %v949, %v967
        %v970 = vadd.f32 %v950, %v968
        %v971 = vld [vmem:[#allocation4 + $0xc0] sm:$0xff]
        %v972 = vld [vmem:[#allocation4 + $0xc8] sm:$0xff]
        %v973 = vld [vmem:[#allocation4 + $0xd0] sm:$0xff]
        %977 = vrot.lane.b32.xlu0 %v971, 94
        %v978 = vpop.permute.xlu0 %977
        %979 = vrot.lane.b32.xlu0 %v972, 94
        %v980 = vpop.permute.xlu0 %979
        %981 = vrot.lane.b32.xlu0 %v973, 94
        %v982 = vpop.permute.xlu0 %981
        %v983 = vsel %vm239, %v978, %v980
        %v984 = vsel %vm239, %v980, %v982
        %v987 = vsel %vm433, 0.0, %v983
        %v988 = vsel %vm434, 0.0, %v984
        %v989 = vsel %vm319, 0.0, %v987
        %v990 = vsel %vm320, 0.0, %v988
        %v991 = vadd.f32 %v969, %v989
        %v992 = vadd.f32 %v970, %v990
        %993 = vst [vmem:[%s163] sm:$0xff] %v991
        %994 = vst [vmem:[%s163 + $0x8] sm:$0xff] %v992
        %s995 = sand.u32 %s93, 1
        %s996 = scalar_lea.sflag [#allocation6], %s995
        %s997 = sand.u32 %s93, 1
        %s998 = smul.addr %s997, 16
        %s999 = scalar_lea.vmem [#allocation5], %s998
        // Predicated region
        $region33: #{tpu_custom_call.1} parent=31 // pred_check
          %p1000 = pneg %p103
        $region34: #{tpu_custom_call.1} parent=31 // pred_check_branch
          %1002 = sbr.rel (%p1000) target = $region36
        $region35: #{tpu_custom_call.1} parent=31 // pred_region
          %1004 = vsyncadd %s996, 0
          %s1005 = smul.addr %s17, 2
          %s1006 = smul.addr %s1005, 8
          %s1007 = scalar_lea.hbm %s3, %s1006
          %s1009 = sshll.u32 %s999, 4
          %s1010 = int_to_ptr.vmem [resolvable:$true] %s1009
          %s1011 = sshll.u32 %s1007, 4
          %s1012 = int_to_ptr.hbm [resolvable:$true] %s1011
          %1014 = dma.vmem_to_hbm [thread:$0]  %s1010, 256, %s1012, %s996
        $region36: #{tpu_custom_call.1} parent=31 // pred_fallthru
          _
      $region32: #{tpu_custom_call.1} parent=5 // pred_fallthru
        _
      %p1015 = scmp.le.s32.totalorder 2, %s12
      // Predicated region
      $region37: #{tpu_custom_call.1} parent=5 // pred_check
        %p1016 = pneg %p1015
      $region38: #{tpu_custom_call.1} parent=5 // pred_check_branch
        %1018 = sbr.rel (%p1016) target = $region40
      $region39: #{tpu_custom_call.1} parent=5 // pred_region
        %s1019 = ssub.s32 %s12, 2
        // Predicated region
        $region41: #{tpu_custom_call.1} parent=39 // pred_check
          %p1020 = pneg %p109
        $region42: #{tpu_custom_call.1} parent=39 // pred_check_branch
          %1022 = sbr.rel (%p1020) target = $region44
        $region43: #{tpu_custom_call.1} parent=39 // pred_region
          %s1023 = sand.u32 %s94, 1
          %s1024 = scalar_lea.sflag [#allocation6], %s1023
          %s1025 = sand.u32 %s94, 1
          %s1026 = smul.addr %s1025, 16
          %s1027 = scalar_lea.vmem [#allocation5], %s1026
          %1029 = dma.done %s1024, 256
        $region44: #{tpu_custom_call.1} parent=39 // pred_fallthru
          _
      $region40: #{tpu_custom_call.1} parent=5 // pred_fallthru
        _
    $region6: #{tpu_custom_call.1} parent=1 // loop_footer
      %s16 = sadd.s32 1, %s12
    $region7: #{tpu_custom_call.1} parent=1 // loop_footer_branch
      %11 = sbr.rel target = $region3
    $region8: #{tpu_custom_call.1} parent=1 // loop_exit
      _
    %1030 = vsyncpa [#allocation6], 1
    %s1031 = scalar_lea.sflag [#allocation6], 1
    %1032 = vsyncpa %s1031, 1

</llo_original>
